<compile_context>
chip_gen: v7x
topology: tpu7x:2x2x1
jax: 0.10.0
libtpu: 0.0.40
codegen_flags: <defaults>
</compile_context>

<pallas_src>
import jax
import jax.numpy as jnp
from jax.experimental import pallas as pl
from jax.experimental.pallas import tpu as pltpu

HID = 8          # hidden channels of conv_1 / conv_2
LANES = 128
SUBLANES = 8


def model_tanh_kernel(p_ref, x_ref, o_ref):
    """Fused 1x1-conv MLP with pixels on the lane axis.

    p_ref: (3*HID + 1,) f32 in SMEM, packed as [w12(8) | b12(8) | w3(8) | b3(1)]
    x_ref: (block_rows, lane_w) f32 in VMEM (lane-dense pixel tile)
    o_ref: (block_rows, lane_w) f32
    """
    x = x_ref[...]
    # Per pixel-vreg: 8 affine FMAs + 8 EUP tanh + 8 muls.  The 8 output terms
    # are combined with a pairwise tree (depth 3) instead of a serial chain
    # (depth 8) so tanh pushes and VPU work can interleave.
    terms = [
        jnp.tanh(x * p_ref[j] + p_ref[HID + j]) * p_ref[2 * HID + j]
        for j in range(HID)
    ]
    while len(terms) > 1:
        terms = [terms[i] + terms[i + 1] for i in range(0, len(terms), 2)]
    o_ref[...] = terms[0] + p_ref[3 * HID]


def init_params(key):
    """Deterministic Conv2d-style (kaiming-uniform) init. Weights stored (C_in, C_out)."""
    def conv_init(k, c_in, c_out):
        k_w, k_b = jax.random.split(k)
        bound = 1.0 / jnp.sqrt(jnp.float32(c_in))  # kernel_size = 1
        w = jax.random.uniform(k_w, (c_in, c_out), jnp.float32, -bound, bound)
        b = jax.random.uniform(k_b, (1, c_out), jnp.float32, -bound, bound)
        return w, b

    k1, k2, k3 = jax.random.split(key, 3)
    w1, b1 = conv_init(k1, 1, HID)
    w2, b2 = conv_init(k2, HID, HID)
    w3, b3 = conv_init(k3, HID, 1)
    return w1, b1, w2, b2, w3, b3


def _fold_params(params):
    """conv_1 o conv_2 folded (exact, both linear) + conv_3, packed flat (25,)."""
    w1, b1, w2, b2, w3, b3 = params
    w12 = (w1 @ w2).reshape(-1)          # (8,)
    b12 = (b1 @ w2 + b2).reshape(-1)     # (8,)
    return jnp.concatenate(
        [w12, b12, w3.reshape(-1), b3.reshape(-1)]).astype(jnp.float32)


def _xla_pointwise(x_nchw, packed):
    """Small-input fallback: same folded math, left to XLA to fuse."""
    x = x_nchw.astype(jnp.float32)
    w12 = packed[:HID][None, :, None, None]
    b12 = packed[HID:2 * HID][None, :, None, None]
    w3 = packed[2 * HID:3 * HID][None, :, None, None]
    b3 = packed[3 * HID]
    h = jnp.tanh(x * w12 + b12)
    y = jnp.sum(h * w3, axis=1, keepdims=True) + b3
    return y.astype(x_nchw.dtype)


def model_tanh_forward(x_nchw, params, *, block_rows=256, lane_w=512):
    assert lane_w % LANES == 0, "lane width must be a multiple of 128"
    N, C, H, W = x_nchw.shape
    assert C == 1, "ModelTanh expects a single input channel"

    packed = _fold_params(params)        # (25,) f32
    P = N * H * W

    # One vreg-row's worth of pixels or less: the pallas_call fixed overhead
    # plus reshapes dominate, so let XLA fuse the pointwise math instead.
    if P < SUBLANES * lane_w:
        return _xla_pointwise(x_nchw, packed)

    rows = pl.cdiv(P, lane_w)
    P_pad = rows * lane_w

    # C == 1 -> the NCHW flatten is metadata-only; pad only the ragged tail.
    x_flat = x_nchw.reshape(P).astype(jnp.float32)
    if P_pad != P:
        x_flat = jnp.pad(x_flat, (0, P_pad - P))
    x_tiles = x_flat.reshape(rows, lane_w)

    # Block sizing: (block_rows, lane_w) f32, double-buffered in + out stays a
    # few MiB -> safe on v5e (16 MiB scoped) and v7x (64 MiB physical).
    if rows <= block_rows:
        block_rows = rows                      # single block == full array dims
    else:
        block_rows = max(SUBLANES, (block_rows // SUBLANES) * SUBLANES)
    num_blocks = pl.cdiv(rows, block_rows)     # ragged last block is masked

    cost = pl.CostEstimate(
        flops=32 * P_pad,                # 8 affine FMAs + 8 muls + 7 adds + bias
        transcendentals=HID * P_pad,     # 8 tanh per pixel
        bytes_accessed=8 * P_pad + 4 * packed.size,
    )

    out_tiles = pl.pallas_call(
        model_tanh_kernel,
        out_shape=jax.ShapeDtypeStruct((rows, lane_w), jnp.float32),
        grid=(num_blocks,),
        in_specs=[
            pl.BlockSpec(memory_space=pltpu.MemorySpace.SMEM),      # packed params
            pl.BlockSpec((block_rows, lane_w), lambda i: (i, 0)),   # pixel block
        ],
        out_specs=pl.BlockSpec((block_rows, lane_w), lambda i: (i, 0)),
        compiler_params=pltpu.CompilerParams(
            dimension_semantics=("parallel",)),                     # 2-TC on v7x
        cost_estimate=cost,
    )(packed, x_tiles)

    out_flat = out_tiles.reshape(P_pad)
    if P_pad != P:
        out_flat = out_flat[:P]          # drop padded-lane garbage (tail only)
    return out_flat.reshape(N, 1, H, W).astype(x_nchw.dtype)


def reference_forward(x_nchw, params):
    """Pure-JAX reference (unfused, matches the PyTorch module op-for-op)."""
    w1, b1, w2, b2, w3, b3 = params
    N, C, H, W = x_nchw.shape
    x = jnp.transpose(x_nchw, (0, 2, 3, 1)).reshape(N * H * W, C).astype(jnp.float32)
    h = x @ w1 + b1
    h = h @ w2 + b2
    h = jnp.tanh(h)
    y = h @ w3 + b3
    return jnp.transpose(y.reshape(N, H, W, w3.shape[1]), (0, 3, 1, 2))


if __name__ == "__main__":
    key = jax.random.PRNGKey(0)
    k_x, k_p = jax.random.split(key)
    params = init_params(k_p)

    # Same shape as the PyTorch snippet: (1, 1, 28, 28).  This is one vreg of
    # work, so it is gated to the plain-XLA pointwise path.
    x1 = jax.random.normal(k_x, (1, 1, 28, 28), dtype=jnp.float32)
    out_small = jax.block_until_ready(model_tanh_forward(x1, params))
    ref_small = reference_forward(x1, params)
    assert out_small.shape == (1, 1, 28, 28)
    assert jnp.allclose(out_small, ref_small, atol=1e-5, rtol=1e-5)

    # Batched input: exercises the gridded, pipelined Pallas kernel
    # (P = 32*784 = 25088 = 49 x 512 lanes; block_rows=16 -> 4 grid steps,
    # ragged last block handled by Pallas masking).
    x_batch = jax.random.normal(k_x, (32, 1, 28, 28), dtype=jnp.float32)
    out_batch = jax.block_until_ready(
        model_tanh_forward(x_batch, params, block_rows=16))
    ref_batch = reference_forward(x_batch, params)
    assert out_batch.shape == (32, 1, 28, 28)
    assert jnp.allclose(out_batch, ref_batch, atol=1e-5, rtol=1e-5)

    print("KERNEL_OK")
</pallas_src>

<mosaic_0001>
module attributes {stable_mosaic.version = 11 : i64} {
  func.func @model_tanh_kernel(%arg0: i32, %arg1: memref<25xf32, #tpu.memory_space<smem>>, %arg2: memref<16x512xf32, #tpu.memory_space<vmem>>, %arg3: memref<16x512xf32, #tpu.memory_space<vmem>>) attributes {dimension_semantics = [#tpu.dimension_semantics<parallel>], iteration_bounds = array<i64: 4>, scalar_prefetch = 0 : i64, scratch_operands = 0 : i64, tpu.core_type = #tpu.core_type<tc>, window_params = [{transform_indices = @transform_0, window_bounds = array<i64: 25>}, {transform_indices = @transform_1, window_bounds = array<i64: 16, 512>}, {transform_indices = @transform_2, window_bounds = array<i64: 16, 512>}]} {
    %c0 = arith.constant 0 : index
    %c0_0 = arith.constant 0 : index
    %0 = vector.load %arg2[%c0, %c0_0] : memref<16x512xf32, #tpu.memory_space<vmem>>, vector<16x512xf32>
    %c0_1 = arith.constant 0 : index
    %1 = memref.load %arg1[%c0_1] : memref<25xf32, #tpu.memory_space<smem>>
    %2 = vector.broadcast %1 : f32 to vector<16x512xf32>
    %3 = arith.mulf %0, %2 : vector<16x512xf32>
    %c8 = arith.constant 8 : index
    %4 = memref.load %arg1[%c8] : memref<25xf32, #tpu.memory_space<smem>>
    %5 = vector.broadcast %4 : f32 to vector<16x512xf32>
    %6 = arith.addf %3, %5 : vector<16x512xf32>
    %7 = math.tanh %6 : vector<16x512xf32>
    %c16 = arith.constant 16 : index
    %8 = memref.load %arg1[%c16] : memref<25xf32, #tpu.memory_space<smem>>
    %9 = vector.broadcast %8 : f32 to vector<16x512xf32>
    %10 = arith.mulf %7, %9 : vector<16x512xf32>
    %c1 = arith.constant 1 : index
    %11 = memref.load %arg1[%c1] : memref<25xf32, #tpu.memory_space<smem>>
    %12 = vector.broadcast %11 : f32 to vector<16x512xf32>
    %13 = arith.mulf %0, %12 : vector<16x512xf32>
    %c9 = arith.constant 9 : index
    %14 = memref.load %arg1[%c9] : memref<25xf32, #tpu.memory_space<smem>>
    %15 = vector.broadcast %14 : f32 to vector<16x512xf32>
    %16 = arith.addf %13, %15 : vector<16x512xf32>
    %17 = math.tanh %16 : vector<16x512xf32>
    %c17 = arith.constant 17 : index
    %18 = memref.load %arg1[%c17] : memref<25xf32, #tpu.memory_space<smem>>
    %19 = vector.broadcast %18 : f32 to vector<16x512xf32>
    %20 = arith.mulf %17, %19 : vector<16x512xf32>
    %c2 = arith.constant 2 : index
    %21 = memref.load %arg1[%c2] : memref<25xf32, #tpu.memory_space<smem>>
    %22 = vector.broadcast %21 : f32 to vector<16x512xf32>
    %23 = arith.mulf %0, %22 : vector<16x512xf32>
    %c10 = arith.constant 10 : index
    %24 = memref.load %arg1[%c10] : memref<25xf32, #tpu.memory_space<smem>>
    %25 = vector.broadcast %24 : f32 to vector<16x512xf32>
    %26 = arith.addf %23, %25 : vector<16x512xf32>
    %27 = math.tanh %26 : vector<16x512xf32>
    %c18 = arith.constant 18 : index
    %28 = memref.load %arg1[%c18] : memref<25xf32, #tpu.memory_space<smem>>
    %29 = vector.broadcast %28 : f32 to vector<16x512xf32>
    %30 = arith.mulf %27, %29 : vector<16x512xf32>
    %c3 = arith.constant 3 : index
    %31 = memref.load %arg1[%c3] : memref<25xf32, #tpu.memory_space<smem>>
    %32 = vector.broadcast %31 : f32 to vector<16x512xf32>
    %33 = arith.mulf %0, %32 : vector<16x512xf32>
    %c11 = arith.constant 11 : index
    %34 = memref.load %arg1[%c11] : memref<25xf32, #tpu.memory_space<smem>>
    %35 = vector.broadcast %34 : f32 to vector<16x512xf32>
    %36 = arith.addf %33, %35 : vector<16x512xf32>
    %37 = math.tanh %36 : vector<16x512xf32>
    %c19 = arith.constant 19 : index
    %38 = memref.load %arg1[%c19] : memref<25xf32, #tpu.memory_space<smem>>
    %39 = vector.broadcast %38 : f32 to vector<16x512xf32>
    %40 = arith.mulf %37, %39 : vector<16x512xf32>
    %c4 = arith.constant 4 : index
    %41 = memref.load %arg1[%c4] : memref<25xf32, #tpu.memory_space<smem>>
    %42 = vector.broadcast %41 : f32 to vector<16x512xf32>
    %43 = arith.mulf %0, %42 : vector<16x512xf32>
    %c12 = arith.constant 12 : index
    %44 = memref.load %arg1[%c12] : memref<25xf32, #tpu.memory_space<smem>>
    %45 = vector.broadcast %44 : f32 to vector<16x512xf32>
    %46 = arith.addf %43, %45 : vector<16x512xf32>
    %47 = math.tanh %46 : vector<16x512xf32>
    %c20 = arith.constant 20 : index
    %48 = memref.load %arg1[%c20] : memref<25xf32, #tpu.memory_space<smem>>
    %49 = vector.broadcast %48 : f32 to vector<16x512xf32>
    %50 = arith.mulf %47, %49 : vector<16x512xf32>
    %c5 = arith.constant 5 : index
    %51 = memref.load %arg1[%c5] : memref<25xf32, #tpu.memory_space<smem>>
    %52 = vector.broadcast %51 : f32 to vector<16x512xf32>
    %53 = arith.mulf %0, %52 : vector<16x512xf32>
    %c13 = arith.constant 13 : index
    %54 = memref.load %arg1[%c13] : memref<25xf32, #tpu.memory_space<smem>>
    %55 = vector.broadcast %54 : f32 to vector<16x512xf32>
    %56 = arith.addf %53, %55 : vector<16x512xf32>
    %57 = math.tanh %56 : vector<16x512xf32>
    %c21 = arith.constant 21 : index
    %58 = memref.load %arg1[%c21] : memref<25xf32, #tpu.memory_space<smem>>
    %59 = vector.broadcast %58 : f32 to vector<16x512xf32>
    %60 = arith.mulf %57, %59 : vector<16x512xf32>
    %c6 = arith.constant 6 : index
    %61 = memref.load %arg1[%c6] : memref<25xf32, #tpu.memory_space<smem>>
    %62 = vector.broadcast %61 : f32 to vector<16x512xf32>
    %63 = arith.mulf %0, %62 : vector<16x512xf32>
    %c14 = arith.constant 14 : index
    %64 = memref.load %arg1[%c14] : memref<25xf32, #tpu.memory_space<smem>>
    %65 = vector.broadcast %64 : f32 to vector<16x512xf32>
    %66 = arith.addf %63, %65 : vector<16x512xf32>
    %67 = math.tanh %66 : vector<16x512xf32>
    %c22 = arith.constant 22 : index
    %68 = memref.load %arg1[%c22] : memref<25xf32, #tpu.memory_space<smem>>
    %69 = vector.broadcast %68 : f32 to vector<16x512xf32>
    %70 = arith.mulf %67, %69 : vector<16x512xf32>
    %c7 = arith.constant 7 : index
    %71 = memref.load %arg1[%c7] : memref<25xf32, #tpu.memory_space<smem>>
    %72 = vector.broadcast %71 : f32 to vector<16x512xf32>
    %73 = arith.mulf %0, %72 : vector<16x512xf32>
    %c15 = arith.constant 15 : index
    %74 = memref.load %arg1[%c15] : memref<25xf32, #tpu.memory_space<smem>>
    %75 = vector.broadcast %74 : f32 to vector<16x512xf32>
    %76 = arith.addf %73, %75 : vector<16x512xf32>
    %77 = math.tanh %76 : vector<16x512xf32>
    %c23 = arith.constant 23 : index
    %78 = memref.load %arg1[%c23] : memref<25xf32, #tpu.memory_space<smem>>
    %79 = vector.broadcast %78 : f32 to vector<16x512xf32>
    %80 = arith.mulf %77, %79 : vector<16x512xf32>
    %81 = arith.addf %10, %20 : vector<16x512xf32>
    %82 = arith.addf %30, %40 : vector<16x512xf32>
    %83 = arith.addf %50, %60 : vector<16x512xf32>
    %84 = arith.addf %70, %80 : vector<16x512xf32>
    %85 = arith.addf %81, %82 : vector<16x512xf32>
    %86 = arith.addf %83, %84 : vector<16x512xf32>
    %87 = arith.addf %85, %86 : vector<16x512xf32>
    %c24 = arith.constant 24 : index
    %88 = memref.load %arg1[%c24] : memref<25xf32, #tpu.memory_space<smem>>
    %89 = vector.broadcast %88 : f32 to vector<16x512xf32>
    %90 = arith.addf %87, %89 : vector<16x512xf32>
    %c0_2 = arith.constant 0 : index
    %c0_3 = arith.constant 0 : index
    %91 = vector.load %arg3[%c0_2, %c0_3] : memref<16x512xf32, #tpu.memory_space<vmem>>, vector<16x512xf32>
    tpu.vector_store %arg3[%c0_2, %c0_3], %90 {strides = array<i32>} : memref<16x512xf32, #tpu.memory_space<vmem>>, vector<16x512xf32>,
    return
  }
  func.func @transform_0(%arg0: i32) -> i32 {
    %c0_i32 = arith.constant 0 : i32
    %c0_i32_0 = arith.constant 0 : i32
    return %c0_i32 : i32
  }
  func.func @transform_1(%arg0: i32) -> (i32, i32) {
    %c0_i32 = arith.constant 0 : i32
    %c0_i32_0 = arith.constant 0 : i32
    return %arg0, %c0_i32 : i32, i32
  }
  func.func @transform_2(%arg0: i32) -> (i32, i32) {
    %c0_i32 = arith.constant 0 : i32
    %c0_i32_0 = arith.constant 0 : i32
    return %arg0, %c0_i32 : i32, i32
  }
}

</mosaic_0001>

<llo_original>
// kernel: tpu_custom_call.1
$region0: #{tpu_custom_call.1}
  #allocation0 [shape = 'u32[]', space=smem, size = 0x4, offset = 0x4, fixed_abs, tag = 'smem constant byte address 0x4 - core index']
  #allocation1 [shape = 'u32[144,128]{1,0:T(1,128)}', space=vmem, size = 0x12000, scoped, tag = 'internal scratch']
  %s0 = inlined_call_operand.hbm [shape: f32[25], index: 0, kind: input, shape index: {}]
  %s1 = inlined_call_operand.hbm [shape: f32[49,512], index: 1, kind: input, shape index: {}]
  %s2 = inlined_call_operand.hbm [shape: f32[49,512], index: 2, kind: output, shape index: {}]
  %s3 = sld [smem:[#allocation0]]
  $region49: #{tpu_custom_call.1} parent=0
    _
  %s5 = ssub.s32 1, %s3
  %s6 = scalar_select 0, %s5, %s3
  $region1: #{tpu_custom_call.1} parent=0
    #allocation2 [shape = 'u8[512]{0}', space=smem, size = 0x200, scoped, tag = 'input window, operand 0, single buffered']
    #allocation3 [shape = 's32[2]{0}', space=sflag, size = 0x8, scoped, tag = 'scoped memory for tpu_custom_call.1']
    #allocation4 [shape = 's32[2]{0}', space=sflag, size = 0x8, scoped, tag = 'scoped memory for tpu_custom_call.1']
    #allocation5 [shape = 's32[2]{0}', space=sflag, size = 0x8, scoped, tag = 'scoped memory for tpu_custom_call.1']
    #allocation6 [shape = 'u8[65536]{0}', space=vmem, size = 0x10000, scoped, tag = 'input window, operand 1']
    #allocation7 [shape = 'u8[65536]{0}', space=vmem, size = 0x10000, scoped, tag = 'output window, operand 0']
    %7 = vsyncpa [#allocation5], 0
    %8 = vsyncpa [#allocation3], 0
    %s9 = scalar_lea.sflag [#allocation3], 1
    %10 = vsyncpa %s9, 0
    %11 = vsyncpa [#allocation4], 0
    %s12 = scalar_lea.sflag [#allocation4], 1
    %13 = vsyncpa %s12, 0
    loop: start=0, step=1, limit=6
    $region2: #{tpu_custom_call.1} parent=1 // loop_pre_header
      _
    $region3: #{tpu_custom_call.1} parent=1 // loop_header
      %s15 = sphi 0, %s19
      %p16 = scmp.ge.s32.totalorder %s15, 6
      %s23 = sphi 0, %s23
      %s25 = sphi 0, %s23
      %s26 = sphi 0, %s25
      %s40 = sphi 0, %s26
      %s46 = sphi 0, %s48
      %s49 = sphi 0, %s46
      %s50 = sphi 0, %s49
      %s66 = sphi 0, %s50
      %s72 = sphi 0, %s74
      %s75 = sphi 0, %s72
      %s76 = sphi 0, %s75
      %s92 = sphi 0, %s76
    $region4: #{tpu_custom_call.1} parent=1 // loop_header_branch
      %18 = sbr.rel (%p16) target = $region8
    $region5: #{tpu_custom_call.1} parent=1 // loop_body
      %s20 = ssub.s32 %s15, 1
      %s21 = ssub.s32 %s15, 2
      %s22 = sadd.s32 %s15, 1
      %s24 = sadd.s32 %s23, 1
      %p27 = scmp.eq.s32.totalorder %s15, 3
      %p28 = scmp.ne.s32.totalorder %s23, %s25
      %p29 = scmp.eq.s32.totalorder %s15, 0
      %p30 = por %p28, %p29
      %p31 = scmp.ne.s32.totalorder %s23, %s25
      %p32 = scmp.eq.s32.totalorder %s20, 3
      %p33 = por %p31, %p32
      %p34 = scmp.ne.s32.totalorder %s25, %s26
      %p35 = scmp.eq.s32.totalorder %s20, 0
      %p36 = por %p34, %p35
      %p37 = scmp.ne.s32.totalorder %s25, %s26
      %p38 = scmp.eq.s32.totalorder %s21, 3
      %p39 = por %p37, %p38
      %p41 = scmp.ne.s32.totalorder %s26, %s40
      %p42 = scmp.eq.s32.totalorder %s21, 0
      %p43 = por %p41, %p42
      %s44 = ssub.s32 %s15, %s22
      %p45 = scmp.eq.s32.totalorder %s44, 0
      %s47 = sadd.s32 %s46, 1
      %s48 = scalar_select %p45, %s46, %s47
      %p51 = pneg %p45
      %p52 = scmp.eq.s32.totalorder %s15, 3
      %p53 = por %p51, %p52
      %p54 = scmp.ne.s32.totalorder %s46, %s49
      %p55 = scmp.eq.s32.totalorder %s15, 0
      %p56 = por %p54, %p55
      %p57 = scmp.ne.s32.totalorder %s46, %s49
      %p58 = scmp.eq.s32.totalorder %s20, 3
      %p59 = por %p57, %p58
      %p60 = scmp.ne.s32.totalorder %s49, %s50
      %p61 = scmp.eq.s32.totalorder %s20, 0
      %p62 = por %p60, %p61
      %p63 = scmp.ne.s32.totalorder %s49, %s50
      %p64 = scmp.eq.s32.totalorder %s21, 3
      %p65 = por %p63, %p64
      %p67 = scmp.ne.s32.totalorder %s50, %s66
      %p68 = scmp.eq.s32.totalorder %s21, 0
      %p69 = por %p67, %p68
      %s70 = ssub.s32 %s15, %s22
      %p71 = scmp.eq.s32.totalorder %s70, 0
      %s73 = sadd.s32 %s72, 1
      %s74 = scalar_select %p71, %s72, %s73
      %p77 = pneg %p71
      %p78 = scmp.eq.s32.totalorder %s15, 3
      %p79 = por %p77, %p78
      %p80 = scmp.ne.s32.totalorder %s72, %s75
      %p81 = scmp.eq.s32.totalorder %s15, 0
      %p82 = por %p80, %p81
      %p83 = scmp.ne.s32.totalorder %s72, %s75
      %p84 = scmp.eq.s32.totalorder %s20, 3
      %p85 = por %p83, %p84
      %p86 = scmp.ne.s32.totalorder %s75, %s76
      %p87 = scmp.eq.s32.totalorder %s20, 0
      %p88 = por %p86, %p87
      %p89 = scmp.ne.s32.totalorder %s75, %s76
      %p90 = scmp.eq.s32.totalorder %s21, 3
      %p91 = por %p89, %p90
      %p93 = scmp.ne.s32.totalorder %s76, %s92
      %p94 = scmp.eq.s32.totalorder %s21, 0
      %p95 = por %p93, %p94
      %p96 = scmp.le.s32.totalorder 1, %s15
      %p97 = scmp.lt.s32.totalorder %s15, 5
      %p98 = pnand %p96, %p97
      %p99 = pneg %p98
      // Predicated region
      $region9: #{tpu_custom_call.1} parent=5 // pred_check
        _
      $region10: #{tpu_custom_call.1} parent=5 // pred_check_branch
        %101 = sbr.rel (%p98) target = $region12
      $region11: #{tpu_custom_call.1} parent=5 // pred_region
        %s102 = ssub.s32 %s15, 1
        // Predicated region
        $region13: #{tpu_custom_call.1} parent=11 // pred_check
          %p103 = pneg %p36
        $region14: #{tpu_custom_call.1} parent=11 // pred_check_branch
          %105 = sbr.rel (%p103) target = $region16
        $region15: #{tpu_custom_call.1} parent=11 // pred_region
          %s107 = ssub.s32 16, 16
          %108 = vsyncadd [#allocation5], %s107
          %111 = dma.hbm_to_smem %s0, 16, [#allocation2], [#allocation5]
        $region16: #{tpu_custom_call.1} parent=11 // pred_fallthru
          _
      $region12: #{tpu_custom_call.1} parent=5 // pred_fallthru
        _
      %p112 = scmp.lt.s32.totalorder %s15, 4
      // Predicated region
      $region17: #{tpu_custom_call.1} parent=5 // pred_check
        %p113 = pneg %p112
      $region18: #{tpu_custom_call.1} parent=5 // pred_check_branch
        %115 = sbr.rel (%p113) target = $region20
      $region19: #{tpu_custom_call.1} parent=5 // pred_region
        // Predicated region
        $region21: #{tpu_custom_call.1} parent=19 // pred_check
          %p116 = pneg %p56
        $region22: #{tpu_custom_call.1} parent=19 // pred_check_branch
          %118 = sbr.rel (%p116) target = $region24
        $region23: #{tpu_custom_call.1} parent=19 // pred_region
          %s119 = sand.u32 %s46, 1
          %s120 = scalar_lea.sflag [#allocation3], %s119
          %s121 = sand.u32 %s46, 1
          %s122 = smul.addr %s121, 64
          %s123 = scalar_lea.vmem [#allocation6], %s122
          %s124 = smul.u32 2, %s15
          %s125 = ssub.s32 7, %s124
          %p126 = scmp.lt.s32.totalorder %s125, 2
          %s127 = scalar_select %p126, %s125, 2
          %s128 = smul.u32 128, %s127
          %s129 = smul.u32 %s128, 4
          %s131 = ssub.s32 1024, %s129
          %132 = vsyncadd %s120, %s131
          %p133 = scmp.ne.s32.totalorder 0, %s129
          %s134 = smul.addr %s124, 4
          %s135 = smul.addr %s134, 128
          %s136 = scalar_lea.hbm %s1, %s135
          %s137 = smul.u32 32, %s127
          %s138 = sshll.u32 %s123, 4
          %s139 = int_to_ptr.vmem [resolvable:$true] %s138
          %s140 = sshll.u32 %s137, 4
          %144 = dma.hbm_to_vmem [thread:$0]  (%p133), %s136, %s140, %s139, %s120, 512, 512, 32
        $region24: #{tpu_custom_call.1} parent=19 // pred_fallthru
          _
      $region20: #{tpu_custom_call.1} parent=5 // pred_fallthru
        _
      %p145 = scmp.le.s32.totalorder 1, %s15
      %p146 = scmp.lt.s32.totalorder %s15, 5
      %p147 = pnand %p145, %p146
      %p148 = pneg %p147
      // Predicated region
      $region25: #{tpu_custom_call.1} parent=5 // pred_check
        _
      $region26: #{tpu_custom_call.1} parent=5 // pred_check_branch
        %150 = sbr.rel (%p147) target = $region28
      $region27: #{tpu_custom_call.1} parent=5 // pred_region
        %s151 = ssub.s32 %s15, 1
        // Predicated region
        $region29: #{tpu_custom_call.1} parent=27 // pred_check
          %p152 = pneg %p36
        $region30: #{tpu_custom_call.1} parent=27 // pred_check_branch
          %154 = sbr.rel (%p152) target = $region32
        $region31: #{tpu_custom_call.1} parent=27 // pred_region
          %155 = dma.done [#allocation5], 16
        $region32: #{tpu_custom_call.1} parent=27 // pred_fallthru
          _
        %s156 = sand.u32 %s49, 1
        %s157 = scalar_lea.sflag [#allocation3], %s156
        %s158 = sand.u32 %s49, 1
        %s159 = smul.addr %s158, 64
        %s160 = scalar_lea.vmem [#allocation6], %s159
        // Predicated region
        $region33: #{tpu_custom_call.1} parent=27 // pred_check
          %p161 = pneg %p62
        $region34: #{tpu_custom_call.1} parent=27 // pred_check_branch
          %163 = sbr.rel (%p161) target = $region36
        $region35: #{tpu_custom_call.1} parent=27 // pred_region
          %164 = dma.done %s157, 1024
        $region36: #{tpu_custom_call.1} parent=27 // pred_fallthru
          _
        %165 = sfence
        %p166 = pneg %p36
        %p167 = pneg %p33
        %s168 = sand.u32 %s49, 1
        %s169 = scalar_lea.sflag [#allocation3], %s168
        %s170 = sand.u32 %s49, 1
        %s171 = smul.addr %s170, 64
        %s172 = scalar_lea.vmem [#allocation6], %s171
        %p173 = pneg %p62
        %p174 = pneg %p59
        %p175 = pneg %p88
        %p176 = pneg %p85
        %s177 = sand.u32 %s75, 1
        %s178 = scalar_lea.sflag [#allocation4], %s177
        %s179 = sand.u32 %s75, 1
        %s180 = smul.addr %s179, 64
        %s181 = scalar_lea.vmem [#allocation7], %s180
        %s182 = smul.u32 2, %s20
        %s183 = ssub.s32 7, %s182
        %p184 = scmp.lt.s32.totalorder %s183, 2
        %s185 = scalar_select %p184, %s183, 2
        %s186 = smul.u32 128, %s185
        %s187 = smul.u32 %s186, 4
        %s188 = smul.u32 2, %s20
        %s189 = ssub.s32 7, %s188
        %p190 = scmp.lt.s32.totalorder %s189, 2
        %s191 = scalar_select %p190, %s189, 2
        %s192 = smul.u32 128, %s191
        %s193 = smul.u32 %s192, 4
        %v194 = vld [vmem:[%s160] sm:$0xff]
        %v195 = vld [vmem:[%s160 + $0x8] sm:$0xff]
        %v196 = vld [vmem:[%s160 + $0x10] sm:$0xff]
        %v197 = vld [vmem:[%s160 + $0x18] sm:$0xff]
        %v198 = vld [vmem:[%s160 + $0x20] sm:$0xff]
        %v199 = vld [vmem:[%s160 + $0x28] sm:$0xff]
        %v200 = vld [vmem:[%s160 + $0x30] sm:$0xff]
        %v201 = vld [vmem:[%s160 + $0x38] sm:$0xff]
        %s202 = sld [smem:[#allocation2]]
        %v203 = vstv %s202
        %v204 = vmul.f32 %v194, %v203
        %v205 = vmul.f32 %v195, %v203
        %v206 = vmul.f32 %v196, %v203
        %v207 = vmul.f32 %v197, %v203
        %v208 = vmul.f32 %v198, %v203
        %v209 = vmul.f32 %v199, %v203
        %v210 = vmul.f32 %v200, %v203
        %v211 = vmul.f32 %v201, %v203
        %s212 = sld [smem:[#allocation2 + $0x8]]
        %v213 = vstv %s212
        %v214 = vadd.f32 %v204, %v213
        %v215 = vadd.f32 %v205, %v213
        %v216 = vadd.f32 %v206, %v213
        %v217 = vadd.f32 %v207, %v213
        %v218 = vadd.f32 %v208, %v213
        %v219 = vadd.f32 %v209, %v213
        %v220 = vadd.f32 %v210, %v213
        %v221 = vadd.f32 %v211, %v213
        %v222 = vtanh.pop %v214
        %v223 = vtanh.pop %v215
        %v224 = vtanh.pop %v216
        %v225 = vtanh.pop %v217
        %v226 = vtanh.pop %v218
        %v227 = vtanh.pop %v219
        %v228 = vtanh.pop %v220
        %v229 = vtanh.pop %v221
        %s230 = sld [smem:[#allocation2 + $0x10]]
        %v231 = vstv %s230
        %v232 = vmul.f32 %v222, %v231
        %v233 = vmul.f32 %v223, %v231
        %v234 = vmul.f32 %v224, %v231
        %v235 = vmul.f32 %v225, %v231
        %v236 = vmul.f32 %v226, %v231
        %v237 = vmul.f32 %v227, %v231
        %v238 = vmul.f32 %v228, %v231
        %v239 = vmul.f32 %v229, %v231
        %s240 = sld [smem:[#allocation2 + $0x1]]
        %v241 = vstv %s240
        %v242 = vmul.f32 %v194, %v241
        %v243 = vmul.f32 %v195, %v241
        %v244 = vmul.f32 %v196, %v241
        %v245 = vmul.f32 %v197, %v241
        %v246 = vmul.f32 %v198, %v241
        %v247 = vmul.f32 %v199, %v241
        %v248 = vmul.f32 %v200, %v241
        %v249 = vmul.f32 %v201, %v241
        %s250 = sld [smem:[#allocation2 + $0x9]]
        %v251 = vstv %s250
        %v252 = vadd.f32 %v242, %v251
        %v253 = vadd.f32 %v243, %v251
        %v254 = vadd.f32 %v244, %v251
        %v255 = vadd.f32 %v245, %v251
        %v256 = vadd.f32 %v246, %v251
        %v257 = vadd.f32 %v247, %v251
        %v258 = vadd.f32 %v248, %v251
        %v259 = vadd.f32 %v249, %v251
        %v260 = vtanh.pop %v252
        %v261 = vtanh.pop %v253
        %v262 = vtanh.pop %v254
        %v263 = vtanh.pop %v255
        %v264 = vtanh.pop %v256
        %v265 = vtanh.pop %v257
        %v266 = vtanh.pop %v258
        %v267 = vtanh.pop %v259
        %s268 = sld [smem:[#allocation2 + $0x11]]
        %v269 = vstv %s268
        %v270 = vmul.f32 %v260, %v269
        %v271 = vmul.f32 %v261, %v269
        %v272 = vmul.f32 %v262, %v269
        %v273 = vmul.f32 %v263, %v269
        %v274 = vmul.f32 %v264, %v269
        %v275 = vmul.f32 %v265, %v269
        %v276 = vmul.f32 %v266, %v269
        %v277 = vmul.f32 %v267, %v269
        %s278 = sld [smem:[#allocation2 + $0x2]]
        %v279 = vstv %s278
        %v280 = vmul.f32 %v194, %v279
        %v281 = vmul.f32 %v195, %v279
        %v282 = vmul.f32 %v196, %v279
        %v283 = vmul.f32 %v197, %v279
        %v284 = vmul.f32 %v198, %v279
        %v285 = vmul.f32 %v199, %v279
        %v286 = vmul.f32 %v200, %v279
        %v287 = vmul.f32 %v201, %v279
        %s288 = sld [smem:[#allocation2 + $0xa]]
        %v289 = vstv %s288
        %v290 = vadd.f32 %v280, %v289
        %v291 = vadd.f32 %v281, %v289
        %v292 = vadd.f32 %v282, %v289
        %v293 = vadd.f32 %v283, %v289
        %v294 = vadd.f32 %v284, %v289
        %v295 = vadd.f32 %v285, %v289
        %v296 = vadd.f32 %v286, %v289
        %v297 = vadd.f32 %v287, %v289
        %v298 = vtanh.pop %v290
        %v299 = vtanh.pop %v291
        %v300 = vtanh.pop %v292
        %v301 = vtanh.pop %v293
        %v302 = vtanh.pop %v294
        %v303 = vtanh.pop %v295
        %v304 = vtanh.pop %v296
        %v305 = vtanh.pop %v297
        %s306 = sld [smem:[#allocation2 + $0x12]]
        %v307 = vstv %s306
        %v308 = vmul.f32 %v298, %v307
        %v309 = vmul.f32 %v299, %v307
        %v310 = vmul.f32 %v300, %v307
        %v311 = vmul.f32 %v301, %v307
        %v312 = vmul.f32 %v302, %v307
        %v313 = vmul.f32 %v303, %v307
        %v314 = vmul.f32 %v304, %v307
        %v315 = vmul.f32 %v305, %v307
        %s316 = sld [smem:[#allocation2 + $0x3]]
        %v317 = vstv %s316
        %v318 = vmul.f32 %v194, %v317
        %v319 = vmul.f32 %v195, %v317
        %v320 = vmul.f32 %v196, %v317
        %v321 = vmul.f32 %v197, %v317
        %v322 = vmul.f32 %v198, %v317
        %v323 = vmul.f32 %v199, %v317
        %v324 = vmul.f32 %v200, %v317
        %v325 = vmul.f32 %v201, %v317
        %s326 = sld [smem:[#allocation2 + $0xb]]
        %v327 = vstv %s326
        %v328 = vadd.f32 %v318, %v327
        %v329 = vadd.f32 %v319, %v327
        %v330 = vadd.f32 %v320, %v327
        %v331 = vadd.f32 %v321, %v327
        %v332 = vadd.f32 %v322, %v327
        %v333 = vadd.f32 %v323, %v327
        %v334 = vadd.f32 %v324, %v327
        %v335 = vadd.f32 %v325, %v327
        %v336 = vtanh.pop %v328
        %v337 = vtanh.pop %v329
        %v338 = vtanh.pop %v330
        %v339 = vtanh.pop %v331
        %v340 = vtanh.pop %v332
        %v341 = vtanh.pop %v333
        %v342 = vtanh.pop %v334
        %v343 = vtanh.pop %v335
        %s344 = sld [smem:[#allocation2 + $0x13]]
        %v345 = vstv %s344
        %v346 = vmul.f32 %v336, %v345
        %v347 = vmul.f32 %v337, %v345
        %v348 = vmul.f32 %v338, %v345
        %v349 = vmul.f32 %v339, %v345
        %v350 = vmul.f32 %v340, %v345
        %v351 = vmul.f32 %v341, %v345
        %v352 = vmul.f32 %v342, %v345
        %v353 = vmul.f32 %v343, %v345
        %s354 = sld [smem:[#allocation2 + $0x4]]
        %v355 = vstv %s354
        %v356 = vmul.f32 %v194, %v355
        %v357 = vmul.f32 %v195, %v355
        %v358 = vmul.f32 %v196, %v355
        %v359 = vmul.f32 %v197, %v355
        %v360 = vmul.f32 %v198, %v355
        %v361 = vmul.f32 %v199, %v355
        %v362 = vmul.f32 %v200, %v355
        %v363 = vmul.f32 %v201, %v355
        %s364 = sld [smem:[#allocation2 + $0xc]]
        %v365 = vstv %s364
        %v366 = vadd.f32 %v356, %v365
        %v367 = vadd.f32 %v357, %v365
        %v368 = vadd.f32 %v358, %v365
        %v369 = vadd.f32 %v359, %v365
        %v370 = vadd.f32 %v360, %v365
        %v371 = vadd.f32 %v361, %v365
        %v372 = vadd.f32 %v362, %v365
        %v373 = vadd.f32 %v363, %v365
        %v374 = vtanh.pop %v366
        %v375 = vtanh.pop %v367
        %v376 = vtanh.pop %v368
        %v377 = vtanh.pop %v369
        %v378 = vtanh.pop %v370
        %v379 = vtanh.pop %v371
        %v380 = vtanh.pop %v372
        %v381 = vtanh.pop %v373
        %s382 = sld [smem:[#allocation2 + $0x14]]
        %v383 = vstv %s382
        %v384 = vmul.f32 %v374, %v383
        %v385 = vmul.f32 %v375, %v383
        %v386 = vmul.f32 %v376, %v383
        %v387 = vmul.f32 %v377, %v383
        %v388 = vmul.f32 %v378, %v383
        %v389 = vmul.f32 %v379, %v383
        %v390 = vmul.f32 %v380, %v383
        %v391 = vmul.f32 %v381, %v383
        %s392 = sld [smem:[#allocation2 + $0x5]]
        %v393 = vstv %s392
        %v394 = vmul.f32 %v194, %v393
        %v395 = vmul.f32 %v195, %v393
        %v396 = vmul.f32 %v196, %v393
        %v397 = vmul.f32 %v197, %v393
        %v398 = vmul.f32 %v198, %v393
        %v399 = vmul.f32 %v199, %v393
        %v400 = vmul.f32 %v200, %v393
        %v401 = vmul.f32 %v201, %v393
        %s402 = sld [smem:[#allocation2 + $0xd]]
        %v403 = vstv %s402
        %v404 = vadd.f32 %v394, %v403
        %v405 = vadd.f32 %v395, %v403
        %v406 = vadd.f32 %v396, %v403
        %v407 = vadd.f32 %v397, %v403
        %v408 = vadd.f32 %v398, %v403
        %v409 = vadd.f32 %v399, %v403
        %v410 = vadd.f32 %v400, %v403
        %v411 = vadd.f32 %v401, %v403
        %v412 = vtanh.pop %v404
        %v413 = vtanh.pop %v405
        %v414 = vtanh.pop %v406
        %v415 = vtanh.pop %v407
        %v416 = vtanh.pop %v408
        %v417 = vtanh.pop %v409
        %v418 = vtanh.pop %v410
        %v419 = vtanh.pop %v411
        %s420 = sld [smem:[#allocation2 + $0x15]]
        %v421 = vstv %s420
        %v422 = vmul.f32 %v412, %v421
        %v423 = vmul.f32 %v413, %v421
        %v424 = vmul.f32 %v414, %v421
        %v425 = vmul.f32 %v415, %v421
        %v426 = vmul.f32 %v416, %v421
        %v427 = vmul.f32 %v417, %v421
        %v428 = vmul.f32 %v418, %v421
        %v429 = vmul.f32 %v419, %v421
        %s430 = sld [smem:[#allocation2 + $0x6]]
        %v431 = vstv %s430
        %v432 = vmul.f32 %v194, %v431
        %v433 = vmul.f32 %v195, %v431
        %v434 = vmul.f32 %v196, %v431
        %v435 = vmul.f32 %v197, %v431
        %v436 = vmul.f32 %v198, %v431
        %v437 = vmul.f32 %v199, %v431
        %v438 = vmul.f32 %v200, %v431
        %v439 = vmul.f32 %v201, %v431
        %s440 = sld [smem:[#allocation2 + $0xe]]
        %v441 = vstv %s440
        %v442 = vadd.f32 %v432, %v441
        %v443 = vadd.f32 %v433, %v441
        %v444 = vadd.f32 %v434, %v441
        %v445 = vadd.f32 %v435, %v441
        %v446 = vadd.f32 %v436, %v441
        %v447 = vadd.f32 %v437, %v441
        %v448 = vadd.f32 %v438, %v441
        %v449 = vadd.f32 %v439, %v441
        %v450 = vtanh.pop %v442
        %v451 = vtanh.pop %v443
        %v452 = vtanh.pop %v444
        %v453 = vtanh.pop %v445
        %v454 = vtanh.pop %v446
        %v455 = vtanh.pop %v447
        %v456 = vtanh.pop %v448
        %v457 = vtanh.pop %v449
        %s458 = sld [smem:[#allocation2 + $0x16]]
        %v459 = vstv %s458
        %v460 = vmul.f32 %v450, %v459
        %v461 = vmul.f32 %v451, %v459
        %v462 = vmul.f32 %v452, %v459
        %v463 = vmul.f32 %v453, %v459
        %v464 = vmul.f32 %v454, %v459
        %v465 = vmul.f32 %v455, %v459
        %v466 = vmul.f32 %v456, %v459
        %v467 = vmul.f32 %v457, %v459
        %s468 = sld [smem:[#allocation2 + $0x7]]
        %v469 = vstv %s468
        %v470 = vmul.f32 %v194, %v469
        %v471 = vmul.f32 %v195, %v469
        %v472 = vmul.f32 %v196, %v469
        %v473 = vmul.f32 %v197, %v469
        %v474 = vmul.f32 %v198, %v469
        %v475 = vmul.f32 %v199, %v469
        %v476 = vmul.f32 %v200, %v469
        %v477 = vmul.f32 %v201, %v469
        %s478 = sld [smem:[#allocation2 + $0xf]]
        %v479 = vstv %s478
        %v480 = vadd.f32 %v470, %v479
        %v481 = vadd.f32 %v471, %v479
        %v482 = vadd.f32 %v472, %v479
        %v483 = vadd.f32 %v473, %v479
        %v484 = vadd.f32 %v474, %v479
        %v485 = vadd.f32 %v475, %v479
        %v486 = vadd.f32 %v476, %v479
        %v487 = vadd.f32 %v477, %v479
        %v488 = vtanh.pop %v480
        %v489 = vtanh.pop %v481
        %v490 = vtanh.pop %v482
        %v491 = vtanh.pop %v483
        %v492 = vtanh.pop %v484
        %v493 = vtanh.pop %v485
        %v494 = vtanh.pop %v486
        %v495 = vtanh.pop %v487
        %s496 = sld [smem:[#allocation2 + $0x17]]
        %v497 = vstv %s496
        %v498 = vmul.f32 %v488, %v497
        %v499 = vmul.f32 %v489, %v497
        %v500 = vmul.f32 %v490, %v497
        %v501 = vmul.f32 %v491, %v497
        %v502 = vmul.f32 %v492, %v497
        %v503 = vmul.f32 %v493, %v497
        %v504 = vmul.f32 %v494, %v497
        %v505 = vmul.f32 %v495, %v497
        %v506 = vadd.f32 %v232, %v270
        %v507 = vadd.f32 %v233, %v271
        %v508 = vadd.f32 %v234, %v272
        %v509 = vadd.f32 %v235, %v273
        %v510 = vadd.f32 %v236, %v274
        %v511 = vadd.f32 %v237, %v275
        %v512 = vadd.f32 %v238, %v276
        %v513 = vadd.f32 %v239, %v277
        %v514 = vadd.f32 %v308, %v346
        %v515 = vadd.f32 %v309, %v347
        %v516 = vadd.f32 %v310, %v348
        %v517 = vadd.f32 %v311, %v349
        %v518 = vadd.f32 %v312, %v350
        %v519 = vadd.f32 %v313, %v351
        %v520 = vadd.f32 %v314, %v352
        %v521 = vadd.f32 %v315, %v353
        %v522 = vadd.f32 %v384, %v422
        %v523 = vadd.f32 %v385, %v423
        %v524 = vadd.f32 %v386, %v424
        %v525 = vadd.f32 %v387, %v425
        %v526 = vadd.f32 %v388, %v426
        %v527 = vadd.f32 %v389, %v427
        %v528 = vadd.f32 %v390, %v428
        %v529 = vadd.f32 %v391, %v429
        %v530 = vadd.f32 %v460, %v498
        %v531 = vadd.f32 %v461, %v499
        %v532 = vadd.f32 %v462, %v500
        %v533 = vadd.f32 %v463, %v501
        %v534 = vadd.f32 %v464, %v502
        %v535 = vadd.f32 %v465, %v503
        %v536 = vadd.f32 %v466, %v504
        %v537 = vadd.f32 %v467, %v505
        %v538 = vadd.f32 %v506, %v514
        %v539 = vadd.f32 %v507, %v515
        %v540 = vadd.f32 %v508, %v516
        %v541 = vadd.f32 %v509, %v517
        %v542 = vadd.f32 %v510, %v518
        %v543 = vadd.f32 %v511, %v519
        %v544 = vadd.f32 %v512, %v520
        %v545 = vadd.f32 %v513, %v521
        %v546 = vadd.f32 %v522, %v530
        %v547 = vadd.f32 %v523, %v531
        %v548 = vadd.f32 %v524, %v532
        %v549 = vadd.f32 %v525, %v533
        %v550 = vadd.f32 %v526, %v534
        %v551 = vadd.f32 %v527, %v535
        %v552 = vadd.f32 %v528, %v536
        %v553 = vadd.f32 %v529, %v537
        %v554 = vadd.f32 %v538, %v546
        %v555 = vadd.f32 %v539, %v547
        %v556 = vadd.f32 %v540, %v548
        %v557 = vadd.f32 %v541, %v549
        %v558 = vadd.f32 %v542, %v550
        %v559 = vadd.f32 %v543, %v551
        %v560 = vadd.f32 %v544, %v552
        %v561 = vadd.f32 %v545, %v553
        %s562 = sld [smem:[#allocation2 + $0x18]]
        %v563 = vstv %s562
        %v564 = vadd.f32 %v554, %v563
        %v565 = vadd.f32 %v555, %v563
        %v566 = vadd.f32 %v556, %v563
        %v567 = vadd.f32 %v557, %v563
        %v568 = vadd.f32 %v558, %v563
        %v569 = vadd.f32 %v559, %v563
        %v570 = vadd.f32 %v560, %v563
        %v571 = vadd.f32 %v561, %v563
        %572 = vst [vmem:[%s181] sm:$0xff] %v564
        %573 = vst [vmem:[%s181 + $0x8] sm:$0xff] %v565
        %574 = vst [vmem:[%s181 + $0x10] sm:$0xff] %v566
        %575 = vst [vmem:[%s181 + $0x18] sm:$0xff] %v567
        %576 = vst [vmem:[%s181 + $0x20] sm:$0xff] %v568
        %577 = vst [vmem:[%s181 + $0x28] sm:$0xff] %v569
        %578 = vst [vmem:[%s181 + $0x30] sm:$0xff] %v570
        %579 = vst [vmem:[%s181 + $0x38] sm:$0xff] %v571
        %s580 = sand.u32 %s75, 1
        %s581 = scalar_lea.sflag [#allocation4], %s580
        %s582 = sand.u32 %s75, 1
        %s583 = smul.addr %s582, 64
        %s584 = scalar_lea.vmem [#allocation7], %s583
        // Predicated region
        $region37: #{tpu_custom_call.1} parent=27 // pred_check
          %p585 = pneg %p85
        $region38: #{tpu_custom_call.1} parent=27 // pred_check_branch
          %587 = sbr.rel (%p585) target = $region40
        $region39: #{tpu_custom_call.1} parent=27 // pred_region
          %s588 = smul.u32 2, %s20
          %s589 = ssub.s32 7, %s588
          %p590 = scmp.lt.s32.totalorder %s589, 2
          %s591 = scalar_select %p590, %s589, 2
          %s592 = smul.u32 128, %s591
          %s593 = smul.u32 %s592, 4
          %s595 = ssub.s32 1024, %s593
          %596 = vsyncadd %s581, %s595
          %p597 = scmp.ne.s32.totalorder 0, %s593
          %s598 = smul.addr %s588, 4
          %s599 = smul.addr %s598, 128
          %s600 = scalar_lea.hbm %s2, %s599
          %s601 = smul.u32 32, %s591
          %s602 = sshll.u32 %s584, 4
          %s603 = int_to_ptr.vmem [resolvable:$true] %s602
          %s604 = sshll.u32 %s601, 4
          %608 = dma.vmem_to_hbm [thread:$0]  (%p597), %s603, %s604, %s600, %s581, 512, 512, 32
        $region40: #{tpu_custom_call.1} parent=27 // pred_fallthru
          _
      $region28: #{tpu_custom_call.1} parent=5 // pred_fallthru
        _
      %p609 = scmp.le.s32.totalorder 2, %s15
      // Predicated region
      $region41: #{tpu_custom_call.1} parent=5 // pred_check
        %p610 = pneg %p609
      $region42: #{tpu_custom_call.1} parent=5 // pred_check_branch
        %612 = sbr.rel (%p610) target = $region44
      $region43: #{tpu_custom_call.1} parent=5 // pred_region
        %s613 = ssub.s32 %s15, 2
        // Predicated region
        $region45: #{tpu_custom_call.1} parent=43 // pred_check
          %p614 = pneg %p91
        $region46: #{tpu_custom_call.1} parent=43 // pred_check_branch
          %616 = sbr.rel (%p614) target = $region48
        $region47: #{tpu_custom_call.1} parent=43 // pred_region
          %s617 = sand.u32 %s76, 1
          %s618 = scalar_lea.sflag [#allocation4], %s617
          %s619 = sand.u32 %s76, 1
          %s620 = smul.addr %s619, 64
          %s621 = scalar_lea.vmem [#allocation7], %s620
          %622 = dma.done %s618, 1024
        $region48: #{tpu_custom_call.1} parent=43 // pred_fallthru
          _
      $region44: #{tpu_custom_call.1} parent=5 // pred_fallthru
        _
    $region6: #{tpu_custom_call.1} parent=1 // loop_footer
      %s19 = sadd.s32 1, %s15
    $region7: #{tpu_custom_call.1} parent=1 // loop_footer_branch
      %14 = sbr.rel target = $region3
    $region8: #{tpu_custom_call.1} parent=1 // loop_exit
      _
    %623 = vsyncpa [#allocation3], 1
    %s624 = scalar_lea.sflag [#allocation3], 1
    %625 = vsyncpa %s624, 1
    %626 = vsyncpa [#allocation4], 1
    %s627 = scalar_lea.sflag [#allocation4], 1
    %628 = vsyncpa %s627, 1
    %629 = vsyncpa [#allocation5], 1
    %s630 = scalar_lea.sflag [#allocation5], 1
    %631 = vsyncpa %s630, 1

</llo_original>
